<compile_context>
chip_gen: v7x
topology: tpu7x:2x2x1
jax: 0.10.0
libtpu: 0.0.40
codegen_flags: <defaults>
</compile_context>

<pallas_src>
import functools

import jax
import jax.numpy as jnp
from jax.experimental import pallas as pl
from jax.experimental.pallas import tpu as pltpu


def _recip(x, approx):
    if approx:
        return pl.reciprocal(x, approx=True)
    return 1.0 / x


# ---------------------------------------------------------------------------
# Pallas kernel: grid = (phase, node-row tile).
# ---------------------------------------------------------------------------
def _hgat_kernel(x_ref, a_ref, w_ref, w3_ref, b_ref, gmax_ref, *rest,
                 nt, concat, use_edge, compute_dtype, approx_recip):
    if use_edge:
        node_out_ref, edge_out_ref = rest[0], rest[1]
        eacc_ref, etr_ref, den_ref = rest[2], rest[3], rest[4]
    else:
        node_out_ref, edge_out_ref = rest[0], None
        eacc_ref, etr_ref, den_ref = rest[1], rest[2], rest[3]

    p = pl.program_id(0)   # 0 = build edge embeddings, 1 = emit node/edge outputs
    i = pl.program_id(1)   # node-row tile index
    f32 = jnp.float32
    cd = compute_dtype

    a_f32 = a_ref[...].astype(f32)   # (tn, E) — single adjacency load per step
    shift = gmax_ref[...]            # (1, 1) global max(A): shift / overflow guard

    # ---------------- phase 0: column-softmax reduction over N tiles --------
    @pl.when(p == 0)
    def _phase0():
        @pl.when(i == 0)
        def _init():
            eacc_ref[...] = jnp.zeros_like(eacc_ref)
            den_ref[...] = jnp.zeros_like(den_ref)

        # node transform for this row tile: x @ W (+ bias), f32 accumulation
        x_t = jnp.dot(x_ref[...], w_ref[...], preferred_element_type=f32)
        x_t = x_t + b_ref[...]                                  # (tn, Dout)

        # unnormalized softmax(A.T, dim=1) weights (shift-invariant)
        e_col = jnp.exp(a_f32 - shift)                          # (tn, E), <= 1
        e_col_cd = e_col.astype(cd)

        # numerator: (E, Dout) += e_col^T @ x_t  (trans-A matmul, no transpose)
        eacc_ref[...] += jax.lax.dot_general(
            e_col_cd, x_t.astype(cd), (((0,), (0,)), ((), ())),
            preferred_element_type=f32)
        # denominator: (E, 1) += e_col^T @ 1
        ones_col = jnp.ones((e_col_cd.shape[0], 1), cd)
        den_ref[...] += jax.lax.dot_general(
            e_col_cd, ones_col, (((0,), (0,)), ((), ())),
            preferred_element_type=f32)

        # finalize edge_tr = relu(edge_emb) @ W3 once all N tiles are reduced
        @pl.when(i == nt - 1)
        def _finalize_edges():
            rden = _recip(den_ref[...], approx_recip)            # (E, 1)
            edge_emb = jnp.maximum(eacc_ref[...] * rden, 0.0)    # (E, Dout)
            etr_ref[...] = jnp.dot(edge_emb.astype(cd), w3_ref[...],
                                   preferred_element_type=f32).astype(etr_ref.dtype)
            den_ref[...] = rden                    # keep 1/den for the edge output
            eacc_ref[...] = jnp.zeros_like(eacc_ref)   # reuse as edge-out accumulator

    # ---------------- phase 1: node outputs + edge-output reduction ---------
    @pl.when(p == 1)
    def _phase1():
        # row softmax over hyperedges (rows are complete inside a tile)
        row_max = jnp.max(a_f32, axis=-1, keepdims=True)
        e_row = jnp.exp(a_f32 - row_max)
        inv_row = _recip(jnp.sum(e_row, axis=-1, keepdims=True), approx_recip)
        a_row = e_row * inv_row                                  # softmax(A, dim=1)

        node_att = jnp.dot(a_row.astype(cd), etr_ref[...],
                           preferred_element_type=f32)           # (tn, Dout)
        if concat:
            node_att = jnp.maximum(node_att, 0.0)
        node_out_ref[...] = node_att.astype(node_out_ref.dtype)

        if use_edge:
            e_col_cd = jnp.exp(a_f32 - shift).astype(cd)
            eacc_ref[...] += jax.lax.dot_general(
                e_col_cd, node_att.astype(cd), (((0,), (0,)), ((), ())),
                preferred_element_type=f32)

            @pl.when(i == nt - 1)
            def _finalize_edge_out():
                edge_out_ref[...] = jnp.maximum(
                    eacc_ref[...] * den_ref[...], 0.0).astype(edge_out_ref.dtype)


# ---------------------------------------------------------------------------
# Wrapper: builds the fused, tiled pallas_call.
# ---------------------------------------------------------------------------
def hgat_layer_forward(node_features, adjacency_matrix, root_embeddings=None, *,
                       weight=None, weight2=None, weight3=None, bias=None,
                       transfer=False, concat=True, use_edge=True,
                       compute_dtype=jnp.float32, adjacency_dtype=jnp.bfloat16,
                       out_dtype=jnp.float32, block_rows=None):
    """node_features: (N, Din); adjacency_matrix: (N, E); weights (Din, Dout)/(Dout, Dout)."""
    # root_embeddings is accepted for interface parity with the PyTorch forward
    # but is never used by it.
    del root_embeddings

    N, Din = node_features.shape
    n2, E = adjacency_matrix.shape
    assert n2 == N, "adjacency_matrix must be (num_nodes, num_edges)"

    w_in = weight if transfer else weight2
    assert w_in is not None and weight3 is not None
    Dout = w_in.shape[1]
    assert w_in.shape == (Din, Dout) and weight3.shape == (Dout, Dout)

    cd = jnp.dtype(compute_dtype)
    adt = jnp.dtype(adjacency_dtype)
    odt = jnp.dtype(out_dtype)
    approx_recip = cd != jnp.dtype(jnp.float32)

    # ---- node-row tile size: largest multiple-of-8 divisor within budget ----
    tn = N
    budget = 8 << 20
    for t in (512, 256, 128, 64, 32, 16, 8):
        if block_rows is not None and t > block_rows:
            continue
        if N % t == 0 and 2 * t * (E * adt.itemsize + Din * cd.itemsize) <= budget:
            tn = t
            break
    nt = N // tn

    # ---- wrapper-side casts: halve the HBM streams where exactness allows ---
    x = node_features.astype(cd)
    w = w_in.astype(cd)
    w3 = weight3.astype(cd)
    a = adjacency_matrix.astype(adt)     # 0/1 incidence values are exact in bf16
    gmax = jnp.max(adjacency_matrix).astype(jnp.float32).reshape(1, 1)
    if bias is None:
        b = jnp.zeros((1, Dout), jnp.float32)
    else:
        b = jnp.asarray(bias, jnp.float32).reshape(1, Dout)

    node_spec = pl.BlockSpec((tn, Dout), lambda p, i: (i * p, 0))
    if use_edge:
        out_shape = (jax.ShapeDtypeStruct((N, Dout), odt),
                     jax.ShapeDtypeStruct((E, Dout), odt))
        out_specs = (node_spec, pl.BlockSpec((E, Dout), lambda p, i: (0, 0)))
    else:
        out_shape = jax.ShapeDtypeStruct((N, Dout), odt)
        out_specs = node_spec

    scratch_shapes = [
        pltpu.VMEM((E, Dout), jnp.float32),   # edge numerator / edge-out accumulator
        pltpu.VMEM((E, Dout), cd),            # edge_tr, resident across phase 1
        pltpu.VMEM((E, 1), jnp.float32),      # column-softmax denominator -> 1/den
    ]

    # ---- explicit VMEM budget (double-buffered tiles + weights + scratch) ---
    est = (2 * tn * (Din * cd.itemsize + E * adt.itemsize)
           + 2 * (Din * Dout + Dout * Dout) * cd.itemsize + 2 * Dout * 4
           + 2 * (tn + E) * Dout * odt.itemsize
           + E * Dout * (4 + cd.itemsize) + E * 128 * 4
           + 6 * tn * max(Dout, E) * 4)
    vmem_limit = int(min(max(2 * est, 32 << 20), 100 << 20))

    kernel = functools.partial(_hgat_kernel, nt=nt, concat=concat,
                               use_edge=use_edge, compute_dtype=cd,
                               approx_recip=approx_recip)

    return pl.pallas_call(
        kernel,
        out_shape=out_shape,
        grid_spec=pltpu.PrefetchScalarGridSpec(
            num_scalar_prefetch=0,
            grid=(2, nt),
            in_specs=[
                pl.BlockSpec((tn, Din), lambda p, i: (i * (1 - p), 0)),  # X (phase 0)
                pl.BlockSpec((tn, E), lambda p, i: (i, 0)),              # A (both phases)
                pl.BlockSpec((Din, Dout), lambda p, i: (0, 0)),          # W / W2
                pl.BlockSpec((Dout, Dout), lambda p, i: (0, 0)),         # W3
                pl.BlockSpec((1, Dout), lambda p, i: (0, 0)),            # bias (zeros if None)
                pl.BlockSpec((1, 1), lambda p, i: (0, 0)),               # global max(A)
            ],
            out_specs=out_specs,
            scratch_shapes=scratch_shapes,
        ),
        compiler_params=pltpu.CompilerParams(
            dimension_semantics=("arbitrary", "arbitrary"),
            vmem_limit_bytes=vmem_limit),
    )(x, a, w, w3, b, gmax)


# ---------------------------------------------------------------------------
# Pure-JAX reference (same math) for correctness checks.
# ---------------------------------------------------------------------------
def hgat_reference(node_features, adjacency, weight_in, weight3, *, bias=None,
                   concat=True, use_edge=True):
    x_t = node_features @ weight_in
    if bias is not None:
        x_t = x_t + bias
    a_t = jax.nn.softmax(adjacency.T, axis=1)
    edge_emb = jax.nn.relu(a_t @ x_t)
    edge_tr = edge_emb @ weight3
    a_s = jax.nn.softmax(adjacency, axis=1)
    node_att = a_s @ edge_tr
    if concat:
        node_att = jax.nn.relu(node_att)
    if use_edge:
        edge_out = jax.nn.relu(a_t @ node_att)
        return node_att, edge_out
    return node_att


if __name__ == "__main__":
    # Small, lane-friendly shapes: N nodes, E hyperedges, 128-wide features.
    # block_rows=8 forces 2 row tiles so the two-phase reduction is exercised.
    N, E, Din, Dout = 16, 8, 128, 128

    key = jax.random.PRNGKey(0)
    kx, ka, kw, kw2, kw3, kb, kr = jax.random.split(key, 7)

    node_features = jax.random.normal(kx, (N, Din), jnp.float32)
    adjacency = (jax.random.uniform(ka, (N, E)) < 0.3).astype(jnp.float32)
    root_embeddings = jax.random.normal(kr, (N, Dout), jnp.float32)  # unused by forward

    stdv = 1.0 / (Dout ** 0.5)
    weight = jax.random.uniform(kw, (Din, Dout), jnp.float32, -stdv, stdv)
    weight2 = jax.random.uniform(kw2, (Din, Dout), jnp.float32, -stdv, stdv)
    weight3 = jax.random.uniform(kw3, (Dout, Dout), jnp.float32, -stdv, stdv)
    bias = jax.random.uniform(kb, (Dout,), jnp.float32, -stdv, stdv)

    # --- 1) f32 compute path, tiled grid, use_edge + concat ------------------
    node_out, edge_out = hgat_layer_forward(
        node_features, adjacency, root_embeddings,
        weight=weight, weight2=weight2, weight3=weight3, bias=None,
        transfer=True, concat=True, use_edge=True,
        compute_dtype=jnp.float32, block_rows=8)
    node_out = jax.block_until_ready(node_out)
    edge_out = jax.block_until_ready(edge_out)

    node_ref, edge_ref = hgat_reference(node_features, adjacency, weight,
                                        weight3, concat=True, use_edge=True)
    assert node_out.shape == (N, Dout) and edge_out.shape == (E, Dout)
    assert jnp.allclose(node_out, node_ref, atol=2e-3, rtol=2e-3), "node mismatch (f32)"
    assert jnp.allclose(edge_out, edge_ref, atol=2e-3, rtol=2e-3), "edge mismatch (f32)"

    # --- 2) bf16-MXU path (f32 accumulation), looser tolerance ---------------
    node_bf, edge_bf = hgat_layer_forward(
        node_features, adjacency, root_embeddings,
        weight=weight, weight2=weight2, weight3=weight3, bias=None,
        transfer=True, concat=True, use_edge=True,
        compute_dtype=jnp.bfloat16, block_rows=8)
    node_bf = jax.block_until_ready(node_bf)
    edge_bf = jax.block_until_ready(edge_bf)
    assert jnp.allclose(node_bf.astype(jnp.float32), node_ref, atol=5e-2, rtol=5e-2), \
        "node mismatch (bf16)"
    assert jnp.allclose(edge_bf.astype(jnp.float32), edge_ref, atol=5e-2, rtol=5e-2), \
        "edge mismatch (bf16)"

    # --- 3) transfer=False, bias, no concat relu, no edge output -------------
    node_only = hgat_layer_forward(
        node_features, adjacency, root_embeddings,
        weight=None, weight2=weight2, weight3=weight3, bias=bias,
        transfer=False, concat=False, use_edge=False,
        compute_dtype=jnp.float32, block_rows=8)
    node_only = jax.block_until_ready(node_only)
    node_only_ref = hgat_reference(node_features, adjacency, weight2, weight3,
                                   bias=bias, concat=False, use_edge=False)
    assert jnp.allclose(node_only, node_only_ref, atol=2e-3, rtol=2e-3), \
        "node mismatch (no-edge path)"

    print("KERNEL_OK")
</pallas_src>

<mosaic_0001>
module attributes {stable_mosaic.version = 11 : i64} {
  func.func @_hgat_kernel(%arg0: i32, %arg1: i32, %arg2: memref<8x128xf32, #tpu.memory_space<vmem>>, %arg3: memref<8x8xbf16, #tpu.memory_space<vmem>>, %arg4: memref<128x128xf32, #tpu.memory_space<vmem>>, %arg5: memref<128x128xf32, #tpu.memory_space<vmem>>, %arg6: memref<1x128xf32, #tpu.memory_space<vmem>>, %arg7: memref<1x1xf32, #tpu.memory_space<vmem>>, %arg8: memref<8x128xf32, #tpu.memory_space<vmem>>, %arg9: memref<8x128xf32, #tpu.memory_space<vmem>>, %arg10: memref<8x128xf32, #tpu.memory_space<vmem>>, %arg11: memref<8x128xf32, #tpu.memory_space<vmem>>, %arg12: memref<8x1xf32, #tpu.memory_space<vmem>>) attributes {dimension_semantics = [#tpu.dimension_semantics<arbitrary>, #tpu.dimension_semantics<arbitrary>], iteration_bounds = array<i64: 2, 2>, scalar_prefetch = 0 : i64, scratch_operands = 3 : i64, tpu.core_type = #tpu.core_type<tc>, window_params = [{transform_indices = @transform_0, window_bounds = array<i64: 8, 128>}, {transform_indices = @transform_1, window_bounds = array<i64: 8, 8>}, {pipeline_mode = #tpu.pipeline_mode<synchronous>, transform_indices = @transform_2, window_bounds = array<i64: 128, 128>}, {pipeline_mode = #tpu.pipeline_mode<synchronous>, transform_indices = @transform_3, window_bounds = array<i64: 128, 128>}, {pipeline_mode = #tpu.pipeline_mode<synchronous>, transform_indices = @transform_4, window_bounds = array<i64: 1, 128>}, {pipeline_mode = #tpu.pipeline_mode<synchronous>, transform_indices = @transform_5, window_bounds = array<i64: 1, 1>}, {transform_indices = @transform_6, window_bounds = array<i64: 8, 128>}, {pipeline_mode = #tpu.pipeline_mode<synchronous>, transform_indices = @transform_7, window_bounds = array<i64: 8, 128>}]} {
    %c0 = arith.constant 0 : index
    %c0_0 = arith.constant 0 : index
    %0 = vector.load %arg3[%c0, %c0_0] : memref<8x8xbf16, #tpu.memory_space<vmem>>, vector<8x8xbf16>
    %1 = arith.extf %0 : vector<8x8xbf16> to vector<8x8xf32>
    %c0_1 = arith.constant 0 : index
    %c0_2 = arith.constant 0 : index
    %2 = vector.load %arg7[%c0_1, %c0_2] : memref<1x1xf32, #tpu.memory_space<vmem>>, vector<1x1xf32>
    %c0_i32 = arith.constant 0 : i32
    %3 = arith.cmpi eq, %arg0, %c0_i32 : i32
    %4 = arith.extui %3 : i1 to i32
    %c0_i32_3 = arith.constant 0 : i32
    %5 = arith.cmpi ne, %4, %c0_i32_3 : i32
    scf.if %5 {
      %c0_i32_5 = arith.constant 0 : i32
      %9 = arith.cmpi eq, %arg1, %c0_i32_5 : i32
      %10 = arith.extui %9 : i1 to i32
      %c0_i32_6 = arith.constant 0 : i32
      %11 = arith.cmpi ne, %10, %c0_i32_6 : i32
      scf.if %11 {
        %cst_26 = arith.constant 0.000000e+00 : f32
        %33 = vector.broadcast %cst_26 : f32 to vector<8x128xf32>
        %c0_27 = arith.constant 0 : index
        %c0_28 = arith.constant 0 : index
        %34 = vector.load %arg10[%c0_27, %c0_28] : memref<8x128xf32, #tpu.memory_space<vmem>>, vector<8x128xf32>
        tpu.vector_store %arg10[%c0_27, %c0_28], %33 {strides = array<i32>} : memref<8x128xf32, #tpu.memory_space<vmem>>, vector<8x128xf32>,
        %cst_29 = arith.constant 0.000000e+00 : f32
        %35 = vector.broadcast %cst_29 : f32 to vector<8x1xf32>
        %c0_30 = arith.constant 0 : index
        %c0_31 = arith.constant 0 : index
        %36 = vector.load %arg12[%c0_30, %c0_31] : memref<8x1xf32, #tpu.memory_space<vmem>>, vector<8x1xf32>
        tpu.vector_store %arg12[%c0_30, %c0_31], %35 {strides = array<i32>} : memref<8x1xf32, #tpu.memory_space<vmem>>, vector<8x1xf32>,
      } else {
      }
      %c0_7 = arith.constant 0 : index
      %c0_8 = arith.constant 0 : index
      %12 = vector.load %arg2[%c0_7, %c0_8] : memref<8x128xf32, #tpu.memory_space<vmem>>, vector<8x128xf32>
      %c0_9 = arith.constant 0 : index
      %c0_10 = arith.constant 0 : index
      %13 = vector.load %arg4[%c0_9, %c0_10] : memref<128x128xf32, #tpu.memory_space<vmem>>, vector<128x128xf32>
      %cst = arith.constant dense<0.000000e+00> : vector<8x128xf32>
      %14 = tpu.matmul %12, %13, %cst {dimension_numbers = #tpu.dot_dimension_numbers<[1], [0], [0], [1], [0, 0, 1, 1], [], []>} : vector<8x128xf32>, vector<128x128xf32>, vector<8x128xf32> -> vector<8x128xf32>
      %c0_11 = arith.constant 0 : index
      %c0_12 = arith.constant 0 : index
      %15 = vector.load %arg6[%c0_11, %c0_12] : memref<1x128xf32, #tpu.memory_space<vmem>>, vector<1x128xf32>
      %16 = vector.broadcast %15 : vector<1x128xf32> to vector<8x128xf32>
      %17 = arith.addf %14, %16 : vector<8x128xf32>
      %18 = vector.broadcast %2 : vector<1x1xf32> to vector<8x8xf32>
      %19 = arith.subf %1, %18 : vector<8x8xf32>
      %20 = math.exp %19 : vector<8x8xf32>
      %c0_13 = arith.constant 0 : index
      %c0_14 = arith.constant 0 : index
      %21 = vector.load %arg10[%c0_13, %c0_14] : memref<8x128xf32, #tpu.memory_space<vmem>>, vector<8x128xf32>
      %cst_15 = arith.constant dense<0.000000e+00> : vector<8x128xf32>
      %22 = tpu.matmul %20, %17, %cst_15 {dimension_numbers = #tpu.dot_dimension_numbers<[0], [0], [1], [1], [0, 1, 1, 1], [], []>} : vector<8x8xf32>, vector<8x128xf32>, vector<8x128xf32> -> vector<8x128xf32>
      %23 = arith.addf %21, %22 : vector<8x128xf32>
      %c0_16 = arith.constant 0 : index
      %c0_17 = arith.constant 0 : index
      %24 = vector.load %arg10[%c0_16, %c0_17] : memref<8x128xf32, #tpu.memory_space<vmem>>, vector<8x128xf32>
      tpu.vector_store %arg10[%c0_16, %c0_17], %23 {strides = array<i32>} : memref<8x128xf32, #tpu.memory_space<vmem>>, vector<8x128xf32>,
      %cst_18 = arith.constant 1.000000e+00 : f32
      %25 = vector.broadcast %cst_18 : f32 to vector<8x1xf32>
      %c0_19 = arith.constant 0 : index
      %c0_20 = arith.constant 0 : index
      %26 = vector.load %arg12[%c0_19, %c0_20] : memref<8x1xf32, #tpu.memory_space<vmem>>, vector<8x1xf32>
      %cst_21 = arith.constant dense<0.000000e+00> : vector<8x1xf32>
      %27 = tpu.matmul %20, %25, %cst_21 {dimension_numbers = #tpu.dot_dimension_numbers<[0], [0], [1], [1], [0, 1, 1, 1], [], []>} : vector<8x8xf32>, vector<8x1xf32>, vector<8x1xf32> -> vector<8x1xf32>
      %28 = arith.addf %26, %27 : vector<8x1xf32>
      %c0_22 = arith.constant 0 : index
      %c0_23 = arith.constant 0 : index
      %29 = vector.load %arg12[%c0_22, %c0_23] : memref<8x1xf32, #tpu.memory_space<vmem>>, vector<8x1xf32>
      tpu.vector_store %arg12[%c0_22, %c0_23], %28 {strides = array<i32>} : memref<8x1xf32, #tpu.memory_space<vmem>>, vector<8x1xf32>,
      %c1_i32_24 = arith.constant 1 : i32
      %30 = arith.cmpi eq, %arg1, %c1_i32_24 : i32
      %31 = arith.extui %30 : i1 to i32
      %c0_i32_25 = arith.constant 0 : i32
      %32 = arith.cmpi ne, %31, %c0_i32_25 : i32
      scf.if %32 {
        %c0_26 = arith.constant 0 : index
        %c0_27 = arith.constant 0 : index
        %33 = vector.load %arg12[%c0_26, %c0_27] : memref<8x1xf32, #tpu.memory_space<vmem>>, vector<8x1xf32>
        %cst_28 = arith.constant 1.000000e+00 : f32
        %34 = vector.broadcast %cst_28 : f32 to vector<8x1xf32>
        %35 = arith.divf %34, %33 : vector<8x1xf32>
        %c0_29 = arith.constant 0 : index
        %c0_30 = arith.constant 0 : index
        %36 = vector.load %arg10[%c0_29, %c0_30] : memref<8x128xf32, #tpu.memory_space<vmem>>, vector<8x128xf32>
        %37 = vector.broadcast %35 : vector<8x1xf32> to vector<8x128xf32>
        %38 = arith.mulf %36, %37 : vector<8x128xf32>
        %cst_31 = arith.constant 0.000000e+00 : f32
        %39 = vector.broadcast %cst_31 : f32 to vector<8x128xf32>
        %40 = arith.maximumf %38, %39 : vector<8x128xf32>
        %c0_32 = arith.constant 0 : index
        %c0_33 = arith.constant 0 : index
        %41 = vector.load %arg5[%c0_32, %c0_33] : memref<128x128xf32, #tpu.memory_space<vmem>>, vector<128x128xf32>
        %cst_34 = arith.constant dense<0.000000e+00> : vector<8x128xf32>
        %42 = tpu.matmul %40, %41, %cst_34 {dimension_numbers = #tpu.dot_dimension_numbers<[1], [0], [0], [1], [0, 0, 1, 1], [], []>} : vector<8x128xf32>, vector<128x128xf32>, vector<8x128xf32> -> vector<8x128xf32>
        %c0_35 = arith.constant 0 : index
        %c0_36 = arith.constant 0 : index
        %43 = vector.load %arg11[%c0_35, %c0_36] : memref<8x128xf32, #tpu.memory_space<vmem>>, vector<8x128xf32>
        tpu.vector_store %arg11[%c0_35, %c0_36], %42 {strides = array<i32>} : memref<8x128xf32, #tpu.memory_space<vmem>>, vector<8x128xf32>,
        %c0_37 = arith.constant 0 : index
        %c0_38 = arith.constant 0 : index
        %44 = vector.load %arg12[%c0_37, %c0_38] : memref<8x1xf32, #tpu.memory_space<vmem>>, vector<8x1xf32>
        tpu.vector_store %arg12[%c0_37, %c0_38], %35 {strides = array<i32>} : memref<8x1xf32, #tpu.memory_space<vmem>>, vector<8x1xf32>,
        %cst_39 = arith.constant 0.000000e+00 : f32
        %45 = vector.broadcast %cst_39 : f32 to vector<8x128xf32>
        %c0_40 = arith.constant 0 : index
        %c0_41 = arith.constant 0 : index
        %46 = vector.load %arg10[%c0_40, %c0_41] : memref<8x128xf32, #tpu.memory_space<vmem>>, vector<8x128xf32>
        tpu.vector_store %arg10[%c0_40, %c0_41], %45 {strides = array<i32>} : memref<8x128xf32, #tpu.memory_space<vmem>>, vector<8x128xf32>,
      } else {
      }
    } else {
    }
    %c1_i32 = arith.constant 1 : i32
    %6 = arith.cmpi eq, %arg0, %c1_i32 : i32
    %7 = arith.extui %6 : i1 to i32
    %c0_i32_4 = arith.constant 0 : i32
    %8 = arith.cmpi ne, %7, %c0_i32_4 : i32
    scf.if %8 {
      %cst = arith.constant dense<0xFF800000> : vector<8xf32>
      %9 = vector.multi_reduction <maximumf>, %1, %cst [1] : vector<8x8xf32> to vector<8xf32>
      %10 = vector.shape_cast %9 : vector<8xf32> to vector<8x1xf32>
      %11 = vector.broadcast %10 : vector<8x1xf32> to vector<8x8xf32>
      %12 = arith.subf %1, %11 : vector<8x8xf32>
      %13 = math.exp %12 : vector<8x8xf32>
      %cst_5 = arith.constant dense<0.000000e+00> : vector<8xf32>
      %14 = vector.multi_reduction <add>, %13, %cst_5 [1] : vector<8x8xf32> to vector<8xf32>
      %15 = vector.shape_cast %14 : vector<8xf32> to vector<8x1xf32>
      %cst_6 = arith.constant 1.000000e+00 : f32
      %16 = vector.broadcast %cst_6 : f32 to vector<8x1xf32>
      %17 = arith.divf %16, %15 : vector<8x1xf32>
      %18 = vector.broadcast %17 : vector<8x1xf32> to vector<8x8xf32>
      %19 = arith.mulf %13, %18 : vector<8x8xf32>
      %c0_7 = arith.constant 0 : index
      %c0_8 = arith.constant 0 : index
      %20 = vector.load %arg11[%c0_7, %c0_8] : memref<8x128xf32, #tpu.memory_space<vmem>>, vector<8x128xf32>
      %cst_9 = arith.constant dense<0.000000e+00> : vector<8x128xf32>
      %21 = tpu.matmul %19, %20, %cst_9 {dimension_numbers = #tpu.dot_dimension_numbers<[1], [0], [0], [1], [0, 0, 1, 1], [], []>} : vector<8x8xf32>, vector<8x128xf32>, vector<8x128xf32> -> vector<8x128xf32>
      %cst_10 = arith.constant 0.000000e+00 : f32
      %22 = vector.broadcast %cst_10 : f32 to vector<8x128xf32>
      %23 = arith.maximumf %21, %22 : vector<8x128xf32>
      %c0_11 = arith.constant 0 : index
      %c0_12 = arith.constant 0 : index
      %24 = vector.load %arg8[%c0_11, %c0_12] : memref<8x128xf32, #tpu.memory_space<vmem>>, vector<8x128xf32>
      tpu.vector_store %arg8[%c0_11, %c0_12], %23 {strides = array<i32>} : memref<8x128xf32, #tpu.memory_space<vmem>>, vector<8x128xf32>,
      %25 = vector.broadcast %2 : vector<1x1xf32> to vector<8x8xf32>
      %26 = arith.subf %1, %25 : vector<8x8xf32>
      %27 = math.exp %26 : vector<8x8xf32>
      %c0_13 = arith.constant 0 : index
      %c0_14 = arith.constant 0 : index
      %28 = vector.load %arg10[%c0_13, %c0_14] : memref<8x128xf32, #tpu.memory_space<vmem>>, vector<8x128xf32>
      %cst_15 = arith.constant dense<0.000000e+00> : vector<8x128xf32>
      %29 = tpu.matmul %27, %23, %cst_15 {dimension_numbers = #tpu.dot_dimension_numbers<[0], [0], [1], [1], [0, 1, 1, 1], [], []>} : vector<8x8xf32>, vector<8x128xf32>, vector<8x128xf32> -> vector<8x128xf32>
      %30 = arith.addf %28, %29 : vector<8x128xf32>
      %c0_16 = arith.constant 0 : index
      %c0_17 = arith.constant 0 : index
      %31 = vector.load %arg10[%c0_16, %c0_17] : memref<8x128xf32, #tpu.memory_space<vmem>>, vector<8x128xf32>
      tpu.vector_store %arg10[%c0_16, %c0_17], %30 {strides = array<i32>} : memref<8x128xf32, #tpu.memory_space<vmem>>, vector<8x128xf32>,
      %c1_i32_18 = arith.constant 1 : i32
      %32 = arith.cmpi eq, %arg1, %c1_i32_18 : i32
      %33 = arith.extui %32 : i1 to i32
      %c0_i32_19 = arith.constant 0 : i32
      %34 = arith.cmpi ne, %33, %c0_i32_19 : i32
      scf.if %34 {
        %c0_20 = arith.constant 0 : index
        %c0_21 = arith.constant 0 : index
        %35 = vector.load %arg10[%c0_20, %c0_21] : memref<8x128xf32, #tpu.memory_space<vmem>>, vector<8x128xf32>
        %c0_22 = arith.constant 0 : index
        %c0_23 = arith.constant 0 : index
        %36 = vector.load %arg12[%c0_22, %c0_23] : memref<8x1xf32, #tpu.memory_space<vmem>>, vector<8x1xf32>
        %37 = vector.broadcast %36 : vector<8x1xf32> to vector<8x128xf32>
        %38 = arith.mulf %35, %37 : vector<8x128xf32>
        %cst_24 = arith.constant 0.000000e+00 : f32
        %39 = vector.broadcast %cst_24 : f32 to vector<8x128xf32>
        %40 = arith.maximumf %38, %39 : vector<8x128xf32>
        %c0_25 = arith.constant 0 : index
        %c0_26 = arith.constant 0 : index
        %41 = vector.load %arg9[%c0_25, %c0_26] : memref<8x128xf32, #tpu.memory_space<vmem>>, vector<8x128xf32>
        tpu.vector_store %arg9[%c0_25, %c0_26], %40 {strides = array<i32>} : memref<8x128xf32, #tpu.memory_space<vmem>>, vector<8x128xf32>,
      } else {
      }
    } else {
    }
    return
  }
  func.func @transform_0(%arg0: i32, %arg1: i32) -> (i32, i32) {
    %c1_i32 = arith.constant 1 : i32
    %0 = arith.subi %c1_i32, %arg0 : i32
    %1 = arith.muli %arg1, %0 : i32
    %c0_i32 = arith.constant 0 : i32
    %c0_i32_0 = arith.constant 0 : i32
    return %1, %c0_i32 : i32, i32
  }
  func.func @transform_1(%arg0: i32, %arg1: i32) -> (i32, i32) {
    %c0_i32 = arith.constant 0 : i32
    %c0_i32_0 = arith.constant 0 : i32
    return %arg1, %c0_i32 : i32, i32
  }
  func.func @transform_2(%arg0: i32, %arg1: i32) -> (i32, i32) {
    %c0_i32 = arith.constant 0 : i32
    %c0_i32_0 = arith.constant 0 : i32
    %c0_i32_1 = arith.constant 0 : i32
    return %c0_i32, %c0_i32_0 : i32, i32
  }
  func.func @transform_3(%arg0: i32, %arg1: i32) -> (i32, i32) {
    %c0_i32 = arith.constant 0 : i32
    %c0_i32_0 = arith.constant 0 : i32
    %c0_i32_1 = arith.constant 0 : i32
    return %c0_i32, %c0_i32_0 : i32, i32
  }
  func.func @transform_4(%arg0: i32, %arg1: i32) -> (i32, i32) {
    %c0_i32 = arith.constant 0 : i32
    %c0_i32_0 = arith.constant 0 : i32
    %c0_i32_1 = arith.constant 0 : i32
    return %c0_i32, %c0_i32_0 : i32, i32
  }
  func.func @transform_5(%arg0: i32, %arg1: i32) -> (i32, i32) {
    %c0_i32 = arith.constant 0 : i32
    %c0_i32_0 = arith.constant 0 : i32
    %c0_i32_1 = arith.constant 0 : i32
    return %c0_i32, %c0_i32_0 : i32, i32
  }
  func.func @transform_6(%arg0: i32, %arg1: i32) -> (i32, i32) {
    %0 = arith.muli %arg1, %arg0 : i32
    %c0_i32 = arith.constant 0 : i32
    %c0_i32_0 = arith.constant 0 : i32
    return %0, %c0_i32 : i32, i32
  }
  func.func @transform_7(%arg0: i32, %arg1: i32) -> (i32, i32) {
    %c0_i32 = arith.constant 0 : i32
    %c0_i32_0 = arith.constant 0 : i32
    %c0_i32_1 = arith.constant 0 : i32
    return %c0_i32, %c0_i32_0 : i32, i32
  }
}

</mosaic_0001>

<llo_original>
// kernel: tpu_custom_call.1
$region0: #{tpu_custom_call.1}
  #allocation0 [shape = 'u32[]', space=smem, size = 0x4, offset = 0x4, fixed_abs, tag = 'smem constant byte address 0x4 - core index']
  #allocation1 [shape = 'u32[144,128]{1,0:T(1,128)}', space=vmem, size = 0x12000, scoped, tag = 'internal scratch']
  #allocation2 [shape = 'f32[8,128]{1,0:T(8,128)}', space=vmem, size = 0x1000, scoped, tag = 'scratch operand']
  #allocation3 [shape = 'f32[8,128]{1,0:T(8,128)}', space=vmem, size = 0x1000, scoped, tag = 'scratch operand']
  #allocation4 [shape = 'f32[8,1]{1,0:T(8,128)}', space=vmem, size = 0x1000, scoped, tag = 'scratch operand']
  #allocation5 [shape = 'f32[1,1]{1,0:T(1,128)S(1)}', space=vmem, size = 0x200, scoped, tag = 'scoped memory for tpu_custom_call.1']
  %s0 = inlined_call_operand.hbm [shape: f32[16,128], index: 0, kind: input, shape index: {}]
  %s1 = inlined_call_operand.vmem [shape: bf16[16,8], index: 1, kind: input, shape index: {}]
  %s2 = inlined_call_operand.hbm [shape: f32[128,128], index: 2, kind: input, shape index: {}]
  %s3 = inlined_call_operand.hbm [shape: f32[128,128], index: 3, kind: input, shape index: {}]
  %s4 = inlined_call_operand.vmem [shape: f32[1,128], index: 4, kind: input, shape index: {}]
  %s5 = inlined_call_operand.<no memory space> [shape: f32[1,1], index: 5, kind: input, shape index: {}]
  %s6 = inlined_call_operand.hbm [shape: f32[16,128], index: 6, kind: output, shape index: {0}]
  %s7 = inlined_call_operand.hbm [shape: f32[8,128], index: 7, kind: output, shape index: {1}]
  %8 = xla_tuple %s6, %s7
  %s9 = sld [smem:[#allocation0]]
  $region97: #{tpu_custom_call.1} parent=0
    _
  %s11 = ssub.s32 1, %s9
  %s12 = scalar_select 0, %s11, %s9
  %v13 = vstv %s5
  %14 = vst [vmem:[#allocation5] sm:$0x1] %v13
  $region1: #{tpu_custom_call.1} parent=0
    #allocation6 [shape = 'u8[8192]{0}', space=vmem, size = 0x2000, scoped, tag = 'input window, operand 0']
    #allocation7 [shape = 's32[2]{0}', space=sflag, size = 0x8, scoped, tag = 'scoped memory for tpu_custom_call.1']
    #allocation8 [shape = 's32[2]{0}', space=sflag, size = 0x8, scoped, tag = 'scoped memory for tpu_custom_call.1']
    #allocation9 [shape = 'u8[65536]{0}', space=vmem, size = 0x10000, scoped, tag = 'input window, operand 2, single buffered']
    #allocation10 [shape = 's32[1]{0}', space=sflag, size = 0x4, scoped, tag = 'scoped memory for tpu_custom_call.1']
    #allocation11 [shape = 'u8[65536]{0}', space=vmem, size = 0x10000, scoped, tag = 'input window, operand 3, single buffered']
    #allocation12 [shape = 'u8[8192]{0}', space=vmem, size = 0x2000, scoped, tag = 'output window, operand 0']
    #allocation13 [shape = 'u8[4096]{0}', space=vmem, size = 0x1000, scoped, tag = 'output window, operand 1, single buffered']
    #allocation14 [shape = 's32[1]{0}', space=sflag, size = 0x4, scoped, tag = 'scoped memory for tpu_custom_call.1']
    %15 = vsyncpa [#allocation7], 0
    %s16 = scalar_lea.sflag [#allocation7], 1
    %17 = vsyncpa %s16, 0
    %18 = vsyncpa [#allocation10], 0
    %19 = vsyncpa [#allocation8], 0
    %s20 = scalar_lea.sflag [#allocation8], 1
    %21 = vsyncpa %s20, 0
    %22 = vsyncpa [#allocation14], 0
    loop: start=0, step=1, limit=6
    $region2: #{tpu_custom_call.1} parent=1 // loop_pre_header
      _
    $region3: #{tpu_custom_call.1} parent=1 // loop_header
      %s24 = sphi 0, %s28
      %p25 = scmp.ge.s32.totalorder %s24, 6
      %s31 = sphi 0, %s43
      %s32 = sphi 0, %s39
      %s33 = sphi 0, %s31
      %s34 = sphi 0, %s32
      %s35 = sphi 0, %s33
      %s36 = sphi 0, %s34
      %s50 = sphi 0, %s52
      %s53 = sphi 0, %s50
      %s54 = sphi 0, %s53
      %s70 = sphi 0, %s54
      %s76 = sphi 0, %s78
      %s79 = sphi 0, %s76
      %s80 = sphi 0, %s79
      %s96 = sphi 0, %s80
      %s100 = sphi 0, %s100
      %s102 = sphi 0, %s100
      %s103 = sphi 0, %s102
      %s117 = sphi 0, %s103
      %s121 = sphi 0, %s121
      %s123 = sphi 0, %s121
      %s124 = sphi 0, %s123
      %s138 = sphi 0, %s124
      %s142 = sphi 0, %s142
      %s144 = sphi 0, %s142
      %s145 = sphi 0, %s144
      %s159 = sphi 0, %s145
      %s163 = sphi 0, %s163
      %s165 = sphi 0, %s163
      %s166 = sphi 0, %s165
      %s180 = sphi 0, %s166
      %s188 = sphi 0, %s190
      %s191 = sphi 0, %s188
      %s192 = sphi 0, %s191
      %s208 = sphi 0, %s192
      %s212 = sphi 0, %s212
      %s214 = sphi 0, %s212
      %s215 = sphi 0, %s214
      %s229 = sphi 0, %s215
    $region4: #{tpu_custom_call.1} parent=1 // loop_header_branch
      %27 = sbr.rel (%p25) target = $region8
    $region5: #{tpu_custom_call.1} parent=1 // loop_body
      %s29 = ssub.s32 %s24, 1
      %s30 = ssub.s32 %s24, 2
      %s37 = sadd.s32 1, %s32
      %p38 = scmp.ge.s32.totalorder %s37, 2
      %s39 = scalar_select %p38, 0, %s37
      %s40 = sadd.s32 1, %s31
      %s41 = scalar_select %p38, %s40, %s31
      %p42 = scmp.ge.s32.totalorder %s41, 2
      %s43 = scalar_select %p42, 0, %s41
      %s44 = ssub.s32 1, %s31
      %s45 = smul.u32 %s32, %s44
      %s46 = ssub.s32 1, %s43
      %s47 = smul.u32 %s39, %s46
      %s48 = ssub.s32 %s45, %s47
      %p49 = scmp.eq.s32.totalorder %s48, 0
      %s51 = sadd.s32 %s50, 1
      %s52 = scalar_select %p49, %s50, %s51
      %p55 = pneg %p49
      %p56 = scmp.eq.s32.totalorder %s24, 3
      %p57 = por %p55, %p56
      %p58 = scmp.ne.s32.totalorder %s50, %s53
      %p59 = scmp.eq.s32.totalorder %s24, 0
      %p60 = por %p58, %p59
      %p61 = scmp.ne.s32.totalorder %s50, %s53
      %p62 = scmp.eq.s32.totalorder %s29, 3
      %p63 = por %p61, %p62
      %p64 = scmp.ne.s32.totalorder %s53, %s54
      %p65 = scmp.eq.s32.totalorder %s29, 0
      %p66 = por %p64, %p65
      %p67 = scmp.ne.s32.totalorder %s53, %s54
      %p68 = scmp.eq.s32.totalorder %s30, 3
      %p69 = por %p67, %p68
      %p71 = scmp.ne.s32.totalorder %s54, %s70
      %p72 = scmp.eq.s32.totalorder %s30, 0
      %p73 = por %p71, %p72
      %s74 = ssub.s32 %s32, %s39
      %p75 = scmp.eq.s32.totalorder %s74, 0
      %s77 = sadd.s32 %s76, 1
      %s78 = scalar_select %p75, %s76, %s77
      %p81 = pneg %p75
      %p82 = scmp.eq.s32.totalorder %s24, 3
      %p83 = por %p81, %p82
      %p84 = scmp.ne.s32.totalorder %s76, %s79
      %p85 = scmp.eq.s32.totalorder %s24, 0
      %p86 = por %p84, %p85
      %p87 = scmp.ne.s32.totalorder %s76, %s79
      %p88 = scmp.eq.s32.totalorder %s29, 3
      %p89 = por %p87, %p88
      %p90 = scmp.ne.s32.totalorder %s79, %s80
      %p91 = scmp.eq.s32.totalorder %s29, 0
      %p92 = por %p90, %p91
      %p93 = scmp.ne.s32.totalorder %s79, %s80
      %p94 = scmp.eq.s32.totalorder %s30, 3
      %p95 = por %p93, %p94
      %p97 = scmp.ne.s32.totalorder %s80, %s96
      %p98 = scmp.eq.s32.totalorder %s30, 0
      %p99 = por %p97, %p98
      %s101 = sadd.s32 %s100, 1
      %p104 = scmp.eq.s32.totalorder %s24, 3
      %p105 = scmp.ne.s32.totalorder %s100, %s102
      %p106 = scmp.eq.s32.totalorder %s24, 0
      %p107 = por %p105, %p106
      %p108 = scmp.ne.s32.totalorder %s100, %s102
      %p109 = scmp.eq.s32.totalorder %s29, 3
      %p110 = por %p108, %p109
      %p111 = scmp.ne.s32.totalorder %s102, %s103
      %p112 = scmp.eq.s32.totalorder %s29, 0
      %p113 = por %p111, %p112
      %p114 = scmp.ne.s32.totalorder %s102, %s103
      %p115 = scmp.eq.s32.totalorder %s30, 3
      %p116 = por %p114, %p115
      %p118 = scmp.ne.s32.totalorder %s103, %s117
      %p119 = scmp.eq.s32.totalorder %s30, 0
      %p120 = por %p118, %p119
      %s122 = sadd.s32 %s121, 1
      %p125 = scmp.eq.s32.totalorder %s24, 3
      %p126 = scmp.ne.s32.totalorder %s121, %s123
      %p127 = scmp.eq.s32.totalorder %s24, 0
      %p128 = por %p126, %p127
      %p129 = scmp.ne.s32.totalorder %s121, %s123
      %p130 = scmp.eq.s32.totalorder %s29, 3
      %p131 = por %p129, %p130
      %p132 = scmp.ne.s32.totalorder %s123, %s124
      %p133 = scmp.eq.s32.totalorder %s29, 0
      %p134 = por %p132, %p133
      %p135 = scmp.ne.s32.totalorder %s123, %s124
      %p136 = scmp.eq.s32.totalorder %s30, 3
      %p137 = por %p135, %p136
      %p139 = scmp.ne.s32.totalorder %s124, %s138
      %p140 = scmp.eq.s32.totalorder %s30, 0
      %p141 = por %p139, %p140
      %s143 = sadd.s32 %s142, 1
      %p146 = scmp.eq.s32.totalorder %s24, 3
      %p147 = scmp.ne.s32.totalorder %s142, %s144
      %p148 = scmp.eq.s32.totalorder %s24, 0
      %p149 = por %p147, %p148
      %p150 = scmp.ne.s32.totalorder %s142, %s144
      %p151 = scmp.eq.s32.totalorder %s29, 3
      %p152 = por %p150, %p151
      %p153 = scmp.ne.s32.totalorder %s144, %s145
      %p154 = scmp.eq.s32.totalorder %s29, 0
      %p155 = por %p153, %p154
      %p156 = scmp.ne.s32.totalorder %s144, %s145
      %p157 = scmp.eq.s32.totalorder %s30, 3
      %p158 = por %p156, %p157
      %p160 = scmp.ne.s32.totalorder %s145, %s159
      %p161 = scmp.eq.s32.totalorder %s30, 0
      %p162 = por %p160, %p161
      %s164 = sadd.s32 %s163, 1
      %p167 = scmp.eq.s32.totalorder %s24, 3
      %p168 = scmp.ne.s32.totalorder %s163, %s165
      %p169 = scmp.eq.s32.totalorder %s24, 0
      %p170 = por %p168, %p169
      %p171 = scmp.ne.s32.totalorder %s163, %s165
      %p172 = scmp.eq.s32.totalorder %s29, 3
      %p173 = por %p171, %p172
      %p174 = scmp.ne.s32.totalorder %s165, %s166
      %p175 = scmp.eq.s32.totalorder %s29, 0
      %p176 = por %p174, %p175
      %p177 = scmp.ne.s32.totalorder %s165, %s166
      %p178 = scmp.eq.s32.totalorder %s30, 3
      %p179 = por %p177, %p178
      %p181 = scmp.ne.s32.totalorder %s166, %s180
      %p182 = scmp.eq.s32.totalorder %s30, 0
      %p183 = por %p181, %p182
      %s184 = smul.u32 %s32, %s31
      %s185 = smul.u32 %s39, %s43
      %s186 = ssub.s32 %s184, %s185
      %p187 = scmp.eq.s32.totalorder %s186, 0
      %s189 = sadd.s32 %s188, 1
      %s190 = scalar_select %p187, %s188, %s189
      %p193 = pneg %p187
      %p194 = scmp.eq.s32.totalorder %s24, 3
      %p195 = por %p193, %p194
      %p196 = scmp.ne.s32.totalorder %s188, %s191
      %p197 = scmp.eq.s32.totalorder %s24, 0
      %p198 = por %p196, %p197
      %p199 = scmp.ne.s32.totalorder %s188, %s191
      %p200 = scmp.eq.s32.totalorder %s29, 3
      %p201 = por %p199, %p200
      %p202 = scmp.ne.s32.totalorder %s191, %s192
      %p203 = scmp.eq.s32.totalorder %s29, 0
      %p204 = por %p202, %p203
      %p205 = scmp.ne.s32.totalorder %s191, %s192
      %p206 = scmp.eq.s32.totalorder %s30, 3
      %p207 = por %p205, %p206
      %p209 = scmp.ne.s32.totalorder %s192, %s208
      %p210 = scmp.eq.s32.totalorder %s30, 0
      %p211 = por %p209, %p210
      %s213 = sadd.s32 %s212, 1
      %p216 = scmp.eq.s32.totalorder %s24, 3
      %p217 = scmp.ne.s32.totalorder %s212, %s214
      %p218 = scmp.eq.s32.totalorder %s24, 0
      %p219 = por %p217, %p218
      %p220 = scmp.ne.s32.totalorder %s212, %s214
      %p221 = scmp.eq.s32.totalorder %s29, 3
      %p222 = por %p220, %p221
      %p223 = scmp.ne.s32.totalorder %s214, %s215
      %p224 = scmp.eq.s32.totalorder %s29, 0
      %p225 = por %p223, %p224
      %p226 = scmp.ne.s32.totalorder %s214, %s215
      %p227 = scmp.eq.s32.totalorder %s30, 3
      %p228 = por %p226, %p227
      %p230 = scmp.ne.s32.totalorder %s215, %s229
      %p231 = scmp.eq.s32.totalorder %s30, 0
      %p232 = por %p230, %p231
      %p233 = scmp.le.s32.totalorder 1, %s24
      %p234 = scmp.lt.s32.totalorder %s24, 5
      %p235 = pnand %p233, %p234
      %p236 = pneg %p235
      // Predicated region
      $region9: #{tpu_custom_call.1} parent=5 // pred_check
        _
      $region10: #{tpu_custom_call.1} parent=5 // pred_check_branch
        %238 = sbr.rel (%p235) target = $region12
      $region11: #{tpu_custom_call.1} parent=5 // pred_region
        %s239 = ssub.s32 %s24, 1
        // Predicated region
        $region13: #{tpu_custom_call.1} parent=11 // pred_check
          %p240 = pneg %p113
        $region14: #{tpu_custom_call.1} parent=11 // pred_check_branch
          %242 = sbr.rel (%p240) target = $region16
        $region15: #{tpu_custom_call.1} parent=11 // pred_region
          %s244 = ssub.s32 2048, 2048
          %245 = vsyncadd [#allocation10], %s244
          %s246 = sshll.u32 [#allocation9], 4
          %s247 = int_to_ptr.vmem [resolvable:$true] %s246
          %252 = dma.hbm_to_vmem [thread:$0]  %s2, 2048, %s247, [#allocation10], 128, 128, 8
        $region16: #{tpu_custom_call.1} parent=11 // pred_fallthru
          _
        // Predicated region
        $region17: #{tpu_custom_call.1} parent=11 // pred_check
          %p253 = pneg %p134
        $region18: #{tpu_custom_call.1} parent=11 // pred_check_branch
          %255 = sbr.rel (%p253) target = $region20
        $region19: #{tpu_custom_call.1} parent=11 // pred_region
          %s257 = ssub.s32 2048, 2048
          %258 = vsyncadd [#allocation10], %s257
          %s259 = sshll.u32 [#allocation11], 4
          %s260 = int_to_ptr.vmem [resolvable:$true] %s259
          %265 = dma.hbm_to_vmem [thread:$0]  %s3, 2048, %s260, [#allocation10], 128, 128, 8
        $region20: #{tpu_custom_call.1} parent=11 // pred_fallthru
          _
        // Predicated region
        $region21: #{tpu_custom_call.1} parent=11 // pred_check
          %p266 = pneg %p155
        $region22: #{tpu_custom_call.1} parent=11 // pred_check_branch
          %268 = sbr.rel (%p266) target = $region24
        $region23: #{tpu_custom_call.1} parent=11 // pred_region
          _
        $region24: #{tpu_custom_call.1} parent=11 // pred_fallthru
          _
        // Predicated region
        $region25: #{tpu_custom_call.1} parent=11 // pred_check
          %p269 = pneg %p176
        $region26: #{tpu_custom_call.1} parent=11 // pred_check_branch
          %271 = sbr.rel (%p269) target = $region28
        $region27: #{tpu_custom_call.1} parent=11 // pred_region
          _
        $region28: #{tpu_custom_call.1} parent=11 // pred_fallthru
          _
      $region12: #{tpu_custom_call.1} parent=5 // pred_fallthru
        _
      %p272 = scmp.lt.s32.totalorder %s24, 4
      // Predicated region
      $region29: #{tpu_custom_call.1} parent=5 // pred_check
        %p273 = pneg %p272
      $region30: #{tpu_custom_call.1} parent=5 // pred_check_branch
        %275 = sbr.rel (%p273) target = $region32
      $region31: #{tpu_custom_call.1} parent=5 // pred_region
        // Predicated region
        $region33: #{tpu_custom_call.1} parent=31 // pred_check
          %p276 = pneg %p60
        $region34: #{tpu_custom_call.1} parent=31 // pred_check_branch
          %278 = sbr.rel (%p276) target = $region36
        $region35: #{tpu_custom_call.1} parent=31 // pred_region
          %s279 = sand.u32 %s50, 1
          %s280 = scalar_lea.sflag [#allocation7], %s279
          %s281 = sand.u32 %s50, 1
          %s282 = smul.addr %s281, 8
          %s283 = scalar_lea.vmem [#allocation6], %s282
          %s284 = ssub.s32 1, %s31
          %s285 = smul.u32 %s32, %s284
          %s287 = ssub.s32 128, 128
          %288 = vsyncadd %s280, %s287
          %s289 = smul.addr %s285, 128
          %s290 = scalar_lea.hbm %s0, %s289
          %s292 = sshll.u32 %s283, 4
          %s293 = int_to_ptr.vmem [resolvable:$true] %s292
          %295 = dma.hbm_to_vmem [thread:$0]  %s290, 128, %s293, %s280
        $region36: #{tpu_custom_call.1} parent=31 // pred_fallthru
          _
        // Predicated region
        $region37: #{tpu_custom_call.1} parent=31 // pred_check
          %p296 = pneg %p86
        $region38: #{tpu_custom_call.1} parent=31 // pred_check_branch
          %298 = sbr.rel (%p296) target = $region40
        $region39: #{tpu_custom_call.1} parent=31 // pred_region
          %p299 = scmp.lt.s32.totalorder %s32, 1
          %s300 = scalar_select %p299, %s32, 1
          %s301 = smul.addr %s300, 4
          %s302 = scalar_lea.vmem %s1, %s301
        $region40: #{tpu_custom_call.1} parent=31 // pred_fallthru
          _
      $region32: #{tpu_custom_call.1} parent=5 // pred_fallthru
        _
      %p303 = scmp.le.s32.totalorder 1, %s24
      %p304 = scmp.lt.s32.totalorder %s24, 5
      %p305 = pnand %p303, %p304
      %p306 = pneg %p305
      // Predicated region
      $region41: #{tpu_custom_call.1} parent=5 // pred_check
        _
      $region42: #{tpu_custom_call.1} parent=5 // pred_check_branch
        %308 = sbr.rel (%p305) target = $region44
      $region43: #{tpu_custom_call.1} parent=5 // pred_region
        %s309 = ssub.s32 %s24, 1
        %s310 = sand.u32 %s53, 1
        %s311 = scalar_lea.sflag [#allocation7], %s310
        %s312 = sand.u32 %s53, 1
        %s313 = smul.addr %s312, 8
        %s314 = scalar_lea.vmem [#allocation6], %s313
        // Predicated region
        $region45: #{tpu_custom_call.1} parent=43 // pred_check
          %p315 = pneg %p66
        $region46: #{tpu_custom_call.1} parent=43 // pred_check_branch
          %317 = sbr.rel (%p315) target = $region48
        $region47: #{tpu_custom_call.1} parent=43 // pred_region
          %318 = dma.done %s311, 128
        $region48: #{tpu_custom_call.1} parent=43 // pred_fallthru
          _
        // Predicated region
        $region49: #{tpu_custom_call.1} parent=43 // pred_check
          %p319 = pneg %p113
        $region50: #{tpu_custom_call.1} parent=43 // pred_check_branch
          %321 = sbr.rel (%p319) target = $region52
        $region51: #{tpu_custom_call.1} parent=43 // pred_region
          %322 = dma.done [#allocation10], 2048
        $region52: #{tpu_custom_call.1} parent=43 // pred_fallthru
          _
        // Predicated region
        $region53: #{tpu_custom_call.1} parent=43 // pred_check
          %p323 = pneg %p134
        $region54: #{tpu_custom_call.1} parent=43 // pred_check_branch
          %325 = sbr.rel (%p323) target = $region56
        $region55: #{tpu_custom_call.1} parent=43 // pred_region
          %326 = dma.done [#allocation10], 2048
        $region56: #{tpu_custom_call.1} parent=43 // pred_fallthru
          _
        %s327 = sand.u32 %s53, 1
        %s328 = scalar_lea.sflag [#allocation7], %s327
        %s329 = sand.u32 %s53, 1
        %s330 = smul.addr %s329, 8
        %s331 = scalar_lea.vmem [#allocation6], %s330
        %p332 = pneg %p66
        %p333 = pneg %p63
        %p334 = scmp.lt.s32.totalorder %s34, 1
        %s335 = scalar_select %p334, %s34, 1
        %s336 = smul.addr %s335, 4
        %s337 = scalar_lea.vmem %s1, %s336
        %p338 = pneg %p92
        %p339 = pneg %p89
        %p340 = pneg %p113
        %p341 = pneg %p110
        %p342 = pneg %p134
        %p343 = pneg %p131
        %p344 = pneg %p155
        %p345 = pneg %p152
        %p346 = pneg %p176
        %p347 = pneg %p173
        %p348 = pneg %p204
        %p349 = pneg %p201
        %s350 = sand.u32 %s191, 1
        %s351 = scalar_lea.sflag [#allocation8], %s350
        %s352 = sand.u32 %s191, 1
        %s353 = smul.addr %s352, 8
        %s354 = scalar_lea.vmem [#allocation12], %s353
        %p355 = pneg %p225
        %p356 = pneg %p222
        %s357 = ssub.s32 1, %s33
        %s358 = smul.u32 %s34, %s357
        %p359 = scmp.lt.s32.totalorder %s34, 1
        %s360 = scalar_select %p359, %s34, 1
        %s361 = smul.addr %s360, 4
        %s362 = scalar_lea.vmem %s1, %s361
        %s363 = smul.u32 %s34, %s33
        %v364 = vld [vmem:[%s362] sm:$0xf]
        %v365 = vunpack.c.l.bf16 %v364
        %v366 = vld [vmem:[#allocation5] sm:$0x1]
        %p367 = scmp.eq.s32.totalorder %s33, 0
        // Predicated region
        $region57: #{tpu_custom_call.1} parent=43 // pred_check
          %p368 = pneg %p367
        $region58: #{tpu_custom_call.1} parent=43 // pred_check_branch
          %370 = sbr.rel (%p368) target = $region60
        $region59: #{tpu_custom_call.1} parent=43 // pred_region
          %p371 = scmp.eq.s32.totalorder %s34, 0
          // Predicated region
          $region61: #{tpu_custom_call.1} parent=59 // pred_check
            %p372 = pneg %p371
          $region62: #{tpu_custom_call.1} parent=59 // pred_check_branch
            %374 = sbr.rel (%p372) target = $region64
          $region63: #{tpu_custom_call.1} parent=59 // pred_region
            %375 = vst [vmem:[#allocation2] sm:$0xff] 0.0
            %vm376 = vcmask 7168
            %377 = vst.msk [vmem:[#allocation4] sm:$0xff] %vm376, 0.0
          $region64: #{tpu_custom_call.1} parent=59 // pred_fallthru
            _
          %v378 = vld [vmem:[%s314] sm:$0xff]
          %v379 = vld [vmem:[#allocation9] sm:$0xff]
          %v380 = vld [vmem:[#allocation9 + $0x8] sm:$0xff]
          %v381 = vld [vmem:[#allocation9 + $0x10] sm:$0xff]
          %v382 = vld [vmem:[#allocation9 + $0x18] sm:$0xff]
          %v383 = vld [vmem:[#allocation9 + $0x20] sm:$0xff]
          %v384 = vld [vmem:[#allocation9 + $0x28] sm:$0xff]
          %v385 = vld [vmem:[#allocation9 + $0x30] sm:$0xff]
          %v386 = vld [vmem:[#allocation9 + $0x38] sm:$0xff]
          %v387 = vld [vmem:[#allocation9 + $0x40] sm:$0xff]
          %v388 = vld [vmem:[#allocation9 + $0x48] sm:$0xff]
          %v389 = vld [vmem:[#allocation9 + $0x50] sm:$0xff]
          %v390 = vld [vmem:[#allocation9 + $0x58] sm:$0xff]
          %v391 = vld [vmem:[#allocation9 + $0x60] sm:$0xff]
          %v392 = vld [vmem:[#allocation9 + $0x68] sm:$0xff]
          %v393 = vld [vmem:[#allocation9 + $0x70] sm:$0xff]
          %v394 = vld [vmem:[#allocation9 + $0x78] sm:$0xff]
          %v395 = vld [vmem:[%s4] sm:$0x1]
          %v397 = vlaneseq
          %v398 = vshrl.u32 %v397, 7
          %v399 = vsub.s32 0, %v398
          %v400 = vrot.slane %v395, %v399
          %402 = vmatprep.subr.mxu0 0.0
          %403 = vmatpush1.msra.mxu0 %v379
          %404 = vmatprep.subr.mxu0 0.0
          %405 = vmatpush1.msra.mxu0 %v380
          %406 = vmatprep.subr.mxu0 0.0
          %407 = vmatpush1.msra.mxu0 %v381
          %408 = vmatprep.subr.mxu0 0.0
          %409 = vmatpush1.msra.mxu0 %v382
          %410 = vmatprep.subr.mxu0 0.0
          %411 = vmatpush1.msra.mxu0 %v383
          %412 = vmatprep.subr.mxu0 0.0
          %413 = vmatpush1.msra.mxu0 %v384
          %414 = vmatprep.subr.mxu0 0.0
          %415 = vmatpush1.msra.mxu0 %v385
          %416 = vmatprep.subr.mxu0 0.0
          %417 = vmatpush1.msra.mxu0 %v386
          %418 = vmatprep.subr.mxu0 0.0
          %419 = vmatpush1.msra.mxu0 %v387
          %420 = vmatprep.subr.mxu0 0.0
          %421 = vmatpush1.msra.mxu0 %v388
          %422 = vmatprep.subr.mxu0 0.0
          %423 = vmatpush1.msra.mxu0 %v389
          %424 = vmatprep.subr.mxu0 0.0
          %425 = vmatpush1.msra.mxu0 %v390
          %426 = vmatprep.subr.mxu0 0.0
          %427 = vmatpush1.msra.mxu0 %v391
          %428 = vmatprep.subr.mxu0 0.0
          %429 = vmatpush1.msra.mxu0 %v392
          %430 = vmatprep.subr.mxu0 0.0
          %431 = vmatpush1.msra.mxu0 %v393
          %432 = vmatprep.subr.mxu0 0.0
          %433 = vmatpush1.msra.mxu0 %v394
          %434 = vmatprep.subr.mxu0 0.0
          %435 = vmatpush1.msra.mxu0 0.0
          %436 = vmatprep.subr.mxu0 0.0
          %437 = vmatpush1.msra.mxu0 0.0
          %438 = vmatprep.subr.mxu0 0.0
          %439 = vmatpush1.msra.mxu0 0.0
          %440 = vmatprep.subr.mxu0 0.0
          %441 = vmatpush1.msra.mxu0 0.0
          %442 = vmatprep.subr.mxu0 0.0
          %443 = vmatpush1.msra.mxu0 0.0
          %444 = vmatprep.subr.mxu0 0.0
          %445 = vmatpush1.msra.mxu0 0.0
          %446 = vmatprep.subr.mxu0 0.0
          %447 = vmatpush1.msra.mxu0 0.0
          %448 = vmatprep.subr.mxu0 0.0
          %449 = vmatpush1.msra.mxu0 0.0
          %450 = vmatprep.subr.mxu0 0.0
          %451 = vmatpush1.msra.mxu0 0.0
          %452 = vmatprep.subr.mxu0 0.0
          %453 = vmatpush1.msra.mxu0 0.0
          %454 = vmatprep.subr.mxu0 0.0
          %455 = vmatpush1.msra.mxu0 0.0
          %456 = vmatprep.subr.mxu0 0.0
          %457 = vmatpush1.msra.mxu0 0.0
          %458 = vmatprep.subr.mxu0 0.0
          %459 = vmatpush1.msra.mxu0 0.0
          %460 = vmatprep.subr.mxu0 0.0
          %461 = vmatpush1.msra.mxu0 0.0
          %462 = vmatprep.subr.mxu0 0.0
          %463 = vmatpush1.msra.mxu0 0.0
          %464 = vmatprep.subr.mxu0 0.0
          %465 = vmatpush1.msra.mxu0 0.0
          %466 = vmatprep.mubr.f32.mxu0 0.0
          %467 = vmatmul.mubr.f32.gmra.mrb[0].mxu0 %v378
          %v468 = vpop.f32.mrb[0].mxu0
          %v469 = vadd.f32 %v400, %v468
          %v470 = vpop.f32.mrb[0].mxu0
          %471 = vdwg.mxu0
          %v473 = vlaneseq
          %v474 = vshrl.u32 %v473, 7
          %v475 = vsub.s32 0, %v474
          %v476 = vrot.slane %v366, %v475
          %477 = vset.pattern.permute.xlu0 0
          %478 = vperm.xlu0 %477, %v476
          %v479 = vpop.permute.xlu0 %478
          %v481 = vsub.f32 %v365, %v479
          %v482 = vmul.f32 %v481, 1.442695
          %v483 = vpow.pop %v482
          %v484 = vld [vmem:[#allocation2] sm:$0xff]
          %485 = vxpose.xlu0.b32.start [1/16] %v483, 128
          %486 = vxpose.xlu0.b32.cont [2/16] 0.0, 128
          %487 = vxpose.xlu0.b32.cont [3/16] 0.0, 128
          %488 = vxpose.xlu0.b32.cont [4/16] 0.0, 128
          %489 = vxpose.xlu0.b32.cont [5/16] 0.0, 128
          %490 = vxpose.xlu0.b32.cont [6/16] 0.0, 128
          %491 = vxpose.xlu0.b32.cont [7/16] 0.0, 128
          %492 = vxpose.xlu0.b32.cont [8/16] 0.0, 128
          %493 = vxpose.xlu0.b32.cont [9/16] 0.0, 128
          %494 = vxpose.xlu0.b32.cont [10/16] 0.0, 128
          %495 = vxpose.xlu0.b32.cont [11/16] 0.0, 128
          %496 = vxpose.xlu0.b32.cont [12/16] 0.0, 128
          %497 = vxpose.xlu0.b32.cont [13/16] 0.0, 128
          %498 = vxpose.xlu0.b32.cont [14/16] 0.0, 128
          %499 = vxpose.xlu0.b32.cont [15/16] 0.0, 128
          %500 = vxpose.xlu0.b32.end [16/16] 0.0, 128
          %v501 = vpop.trf.xlu0
          %v502 = vpop.trf.xlu0
          %v503 = vpop.trf.xlu0
          %v504 = vpop.trf.xlu0
          %v505 = vpop.trf.xlu0
          %v506 = vpop.trf.xlu0
          %v507 = vpop.trf.xlu0
          %v508 = vpop.trf.xlu0
          %v509 = vpop.trf.xlu0
          %v510 = vpop.trf.xlu0
          %v511 = vpop.trf.xlu0
          %v512 = vpop.trf.xlu0
          %v513 = vpop.trf.xlu0
          %v514 = vpop.trf.xlu0
          %v515 = vpop.trf.xlu0
          %v516 = vpop.trf.xlu0
          %vm517 = vcmask 64512
          %v519 = vsel %vm517, %v501, 0
          %521 = vmatprep.subr.mxu0 0.0
          %522 = vmatpush1.msra.mxu0 %v469
          %523 = vmatprep.subr.mxu0 0.0
          %524 = vmatpush1.msra.mxu0 0.0
          %525 = vmatprep.subr.mxu0 0.0
          %526 = vmatpush1.msra.mxu0 0.0
          %527 = vmatprep.subr.mxu0 0.0
          %528 = vmatpush1.msra.mxu0 0.0
          %529 = vmatprep.subr.mxu0 0.0
          %530 = vmatpush1.msra.mxu0 0.0
          %531 = vmatprep.subr.mxu0 0.0
          %532 = vmatpush1.msra.mxu0 0.0
          %533 = vmatprep.subr.mxu0 0.0
          %534 = vmatpush1.msra.mxu0 0.0
          %535 = vmatprep.subr.mxu0 0.0
          %536 = vmatpush1.msra.mxu0 0.0
          %537 = vmatprep.subr.mxu0 0.0
          %538 = vmatpush1.msra.mxu0 0.0
          %539 = vmatprep.subr.mxu0 0.0
          %540 = vmatpush1.msra.mxu0 0.0
          %541 = vmatprep.subr.mxu0 0.0
          %542 = vmatpush1.msra.mxu0 0.0
          %543 = vmatprep.subr.mxu0 0.0
          %544 = vmatpush1.msra.mxu0 0.0
          %545 = vmatprep.subr.mxu0 0.0
          %546 = vmatpush1.msra.mxu0 0.0
          %547 = vmatprep.subr.mxu0 0.0
          %548 = vmatpush1.msra.mxu0 0.0
          %549 = vmatprep.subr.mxu0 0.0
          %550 = vmatpush1.msra.mxu0 0.0
          %551 = vmatprep.subr.mxu0 0.0
          %552 = vmatpush1.msra.mxu0 0.0
          %553 = vmatprep.subr.mxu0 0.0
          %554 = vmatpush1.msra.mxu0 0.0
          %555 = vmatprep.subr.mxu0 0.0
          %556 = vmatpush1.msra.mxu0 0.0
          %557 = vmatprep.subr.mxu0 0.0
          %558 = vmatpush1.msra.mxu0 0.0
          %559 = vmatprep.subr.mxu0 0.0
          %560 = vmatpush1.msra.mxu0 0.0
          %561 = vmatprep.subr.mxu0 0.0
          %562 = vmatpush1.msra.mxu0 0.0
          %563 = vmatprep.subr.mxu0 0.0
          %564 = vmatpush1.msra.mxu0 0.0
          %565 = vmatprep.subr.mxu0 0.0
          %566 = vmatpush1.msra.mxu0 0.0
          %567 = vmatprep.subr.mxu0 0.0
          %568 = vmatpush1.msra.mxu0 0.0
          %569 = vmatprep.subr.mxu0 0.0
          %570 = vmatpush1.msra.mxu0 0.0
          %571 = vmatprep.subr.mxu0 0.0
          %572 = vmatpush1.msra.mxu0 0.0
          %573 = vmatprep.subr.mxu0 0.0
          %574 = vmatpush1.msra.mxu0 0.0
          %575 = vmatprep.subr.mxu0 0.0
          %576 = vmatpush1.msra.mxu0 0.0
          %577 = vmatprep.subr.mxu0 0.0
          %578 = vmatpush1.msra.mxu0 0.0
          %579 = vmatprep.subr.mxu0 0.0
          %580 = vmatpush1.msra.mxu0 0.0
          %581 = vmatprep.subr.mxu0 0.0
          %582 = vmatpush1.msra.mxu0 0.0
          %583 = vmatprep.subr.mxu0 0.0
          %584 = vmatpush1.msra.mxu0 0.0
          %585 = vmatprep.mubr.f32.mxu0 0.0
          %586 = vmatmul.mubr.f32.gmra.mrb[0].mxu0 %v519
          %v587 = vpop.f32.mrb[0].mxu0
          %v588 = vadd.f32 0.0, %v587
          %v589 = vpop.f32.mrb[0].mxu0
          %590 = vdwg.mxu0
          %v591 = vadd.f32 %v484, %v588
          %592 = vst [vmem:[#allocation2] sm:$0xff] %v591
          %v593 = vld [vmem:[#allocation4] sm:$0xff]
          %594 = vmatprep.subr.mxu0 0.0
          %595 = vmatpush1.msra.mxu0 1.0
          %596 = vmatprep.subr.mxu0 0.0
          %597 = vmatpush1.msra.mxu0 0.0
          %598 = vmatprep.subr.mxu0 0.0
          %599 = vmatpush1.msra.mxu0 0.0
          %600 = vmatprep.subr.mxu0 0.0
          %601 = vmatpush1.msra.mxu0 0.0
          %602 = vmatprep.subr.mxu0 0.0
          %603 = vmatpush1.msra.mxu0 0.0
          %604 = vmatprep.subr.mxu0 0.0
          %605 = vmatpush1.msra.mxu0 0.0
          %606 = vmatprep.subr.mxu0 0.0
          %607 = vmatpush1.msra.mxu0 0.0
          %608 = vmatprep.subr.mxu0 0.0
          %609 = vmatpush1.msra.mxu0 0.0
          %610 = vmatprep.subr.mxu0 0.0
          %611 = vmatpush1.msra.mxu0 0.0
          %612 = vmatprep.subr.mxu0 0.0
          %613 = vmatpush1.msra.mxu0 0.0
          %614 = vmatprep.subr.mxu0 0.0
          %615 = vmatpush1.msra.mxu0 0.0
          %616 = vmatprep.subr.mxu0 0.0
          %617 = vmatpush1.msra.mxu0 0.0
          %618 = vmatprep.subr.mxu0 0.0
          %619 = vmatpush1.msra.mxu0 0.0
          %620 = vmatprep.subr.mxu0 0.0
          %621 = vmatpush1.msra.mxu0 0.0
          %622 = vmatprep.subr.mxu0 0.0
          %623 = vmatpush1.msra.mxu0 0.0
          %624 = vmatprep.subr.mxu0 0.0
          %625 = vmatpush1.msra.mxu0 0.0
          %626 = vmatprep.subr.mxu0 0.0
          %627 = vmatpush1.msra.mxu0 0.0
          %628 = vmatprep.subr.mxu0 0.0
          %629 = vmatpush1.msra.mxu0 0.0
          %630 = vmatprep.subr.mxu0 0.0
          %631 = vmatpush1.msra.mxu0 0.0
          %632 = vmatprep.subr.mxu0 0.0
          %633 = vmatpush1.msra.mxu0 0.0
          %634 = vmatprep.subr.mxu0 0.0
          %635 = vmatpush1.msra.mxu0 0.0
          %636 = vmatprep.subr.mxu0 0.0
          %637 = vmatpush1.msra.mxu0 0.0
          %638 = vmatprep.subr.mxu0 0.0
          %639 = vmatpush1.msra.mxu0 0.0
          %640 = vmatprep.subr.mxu0 0.0
          %641 = vmatpush1.msra.mxu0 0.0
          %642 = vmatprep.subr.mxu0 0.0
          %643 = vmatpush1.msra.mxu0 0.0
          %644 = vmatprep.subr.mxu0 0.0
          %645 = vmatpush1.msra.mxu0 0.0
          %646 = vmatprep.subr.mxu0 0.0
          %647 = vmatpush1.msra.mxu0 0.0
          %648 = vmatprep.subr.mxu0 0.0
          %649 = vmatpush1.msra.mxu0 0.0
          %650 = vmatprep.subr.mxu0 0.0
          %651 = vmatpush1.msra.mxu0 0.0
          %652 = vmatprep.subr.mxu0 0.0
          %653 = vmatpush1.msra.mxu0 0.0
          %654 = vmatprep.subr.mxu0 0.0
          %655 = vmatpush1.msra.mxu0 0.0
          %656 = vmatprep.subr.mxu0 0.0
          %657 = vmatpush1.msra.mxu0 0.0
          %658 = vmatprep.mubr.f32.mxu0 0.0
          %659 = vmatmul.mubr.f32.gmra.mrb[0].mxu0 %v519
          %v660 = vpop.f32.mrb[0].mxu0
          %v661 = vadd.f32 0.0, %v660
          %v662 = vpop.f32.mrb[0].mxu0
          %663 = vdwg.mxu0
          %v664 = vadd.f32 %v593, %v661
          %vm665 = vcmask 7168
          %666 = vst.msk [vmem:[#allocation4] sm:$0xff] %vm665, %v664
          %p667 = scmp.eq.s32.totalorder %s34, 1
          // Predicated region
          $region65: #{tpu_custom_call.1} parent=59 // pred_check
            %p668 = pneg %p667
          $region66: #{tpu_custom_call.1} parent=59 // pred_check_branch
            %670 = sbr.rel (%p668) target = $region68
          $region67: #{tpu_custom_call.1} parent=59 // pred_region
            %v671 = vld [vmem:[#allocation4] sm:$0xff]
            %v672 = vrcp.pop %v671
            %v673 = vmul.f32 1.0, %v672
            %v674 = vld [vmem:[#allocation2] sm:$0xff]
            %676 = vset.pattern.permute.xlu0 0
            %677 = vperm.xlu0 %676, %v673
            %v678 = vpop.permute.xlu0 %677
            %v680 = vmul.f32 %v674, %v678
            %v681 = vmax.f32 %v680, 0.0
            %v682 = vld [vmem:[#allocation11] sm:$0xff]
            %v683 = vld [vmem:[#allocation11 + $0x8] sm:$0xff]
            %v684 = vld [vmem:[#allocation11 + $0x10] sm:$0xff]
            %v685 = vld [vmem:[#allocation11 + $0x18] sm:$0xff]
            %v686 = vld [vmem:[#allocation11 + $0x20] sm:$0xff]
            %v687 = vld [vmem:[#allocation11 + $0x28] sm:$0xff]
            %v688 = vld [vmem:[#allocation11 + $0x30] sm:$0xff]
            %v689 = vld [vmem:[#allocation11 + $0x38] sm:$0xff]
            %v690 = vld [vmem:[#allocation11 + $0x40] sm:$0xff]
            %v691 = vld [vmem:[#allocation11 + $0x48] sm:$0xff]
            %v692 = vld [vmem:[#allocation11 + $0x50] sm:$0xff]
            %v693 = vld [vmem:[#allocation11 + $0x58] sm:$0xff]
            %v694 = vld [vmem:[#allocation11 + $0x60] sm:$0xff]
            %v695 = vld [vmem:[#allocation11 + $0x68] sm:$0xff]
            %v696 = vld [vmem:[#allocation11 + $0x70] sm:$0xff]
            %v697 = vld [vmem:[#allocation11 + $0x78] sm:$0xff]
            %698 = vmatprep.subr.mxu0 0.0
            %699 = vmatpush1.msra.mxu0 %v682
            %700 = vmatprep.subr.mxu0 0.0
            %701 = vmatpush1.msra.mxu0 %v683
            %702 = vmatprep.subr.mxu0 0.0
            %703 = vmatpush1.msra.mxu0 %v684
            %704 = vmatprep.subr.mxu0 0.0
            %705 = vmatpush1.msra.mxu0 %v685
            %706 = vmatprep.subr.mxu0 0.0
            %707 = vmatpush1.msra.mxu0 %v686
            %708 = vmatprep.subr.mxu0 0.0
            %709 = vmatpush1.msra.mxu0 %v687
            %710 = vmatprep.subr.mxu0 0.0
            %711 = vmatpush1.msra.mxu0 %v688
            %712 = vmatprep.subr.mxu0 0.0
            %713 = vmatpush1.msra.mxu0 %v689
            %714 = vmatprep.subr.mxu0 0.0
            %715 = vmatpush1.msra.mxu0 %v690
            %716 = vmatprep.subr.mxu0 0.0
            %717 = vmatpush1.msra.mxu0 %v691
            %718 = vmatprep.subr.mxu0 0.0
            %719 = vmatpush1.msra.mxu0 %v692
            %720 = vmatprep.subr.mxu0 0.0
            %721 = vmatpush1.msra.mxu0 %v693
            %722 = vmatprep.subr.mxu0 0.0
            %723 = vmatpush1.msra.mxu0 %v694
            %724 = vmatprep.subr.mxu0 0.0
            %725 = vmatpush1.msra.mxu0 %v695
            %726 = vmatprep.subr.mxu0 0.0
            %727 = vmatpush1.msra.mxu0 %v696
            %728 = vmatprep.subr.mxu0 0.0
            %729 = vmatpush1.msra.mxu0 %v697
            %730 = vmatprep.subr.mxu0 0.0
            %731 = vmatpush1.msra.mxu0 0.0
            %732 = vmatprep.subr.mxu0 0.0
            %733 = vmatpush1.msra.mxu0 0.0
            %734 = vmatprep.subr.mxu0 0.0
            %735 = vmatpush1.msra.mxu0 0.0
            %736 = vmatprep.subr.mxu0 0.0
            %737 = vmatpush1.msra.mxu0 0.0
            %738 = vmatprep.subr.mxu0 0.0
            %739 = vmatpush1.msra.mxu0 0.0
            %740 = vmatprep.subr.mxu0 0.0
            %741 = vmatpush1.msra.mxu0 0.0
            %742 = vmatprep.subr.mxu0 0.0
            %743 = vmatpush1.msra.mxu0 0.0
            %744 = vmatprep.subr.mxu0 0.0
            %745 = vmatpush1.msra.mxu0 0.0
            %746 = vmatprep.subr.mxu0 0.0
            %747 = vmatpush1.msra.mxu0 0.0
            %748 = vmatprep.subr.mxu0 0.0
            %749 = vmatpush1.msra.mxu0 0.0
            %750 = vmatprep.subr.mxu0 0.0
            %751 = vmatpush1.msra.mxu0 0.0
            %752 = vmatprep.subr.mxu0 0.0
            %753 = vmatpush1.msra.mxu0 0.0
            %754 = vmatprep.subr.mxu0 0.0
            %755 = vmatpush1.msra.mxu0 0.0
            %756 = vmatprep.subr.mxu0 0.0
            %757 = vmatpush1.msra.mxu0 0.0
            %758 = vmatprep.subr.mxu0 0.0
            %759 = vmatpush1.msra.mxu0 0.0
            %760 = vmatprep.subr.mxu0 0.0
            %761 = vmatpush1.msra.mxu0 0.0
            %762 = vmatprep.mubr.f32.mxu0 0.0
            %763 = vmatmul.mubr.f32.gmra.mrb[0].mxu0 %v681
            %v764 = vpop.f32.mrb[0].mxu0
            %v765 = vadd.f32 0.0, %v764
            %v766 = vpop.f32.mrb[0].mxu0
            %767 = vdwg.mxu0
            %768 = vst [vmem:[#allocation3] sm:$0xff] %v765
            %769 = vst.msk [vmem:[#allocation4] sm:$0xff] %vm665, %v673
            %770 = vst [vmem:[#allocation2] sm:$0xff] 0.0
          $region68: #{tpu_custom_call.1} parent=59 // pred_fallthru
            _
        $region60: #{tpu_custom_call.1} parent=43 // pred_fallthru
          _
        %p771 = scmp.eq.s32.totalorder %s33, 1
        // Predicated region
        $region69: #{tpu_custom_call.1} parent=43 // pred_check
          %p772 = pneg %p771
        $region70: #{tpu_custom_call.1} parent=43 // pred_check_branch
          %774 = sbr.rel (%p772) target = $region72
        $region71: #{tpu_custom_call.1} parent=43 // pred_region
          %vm775 = vcmask 64512
          %v776 = vsel %vm775, %v365, -inf
          %777 = vmax.xlane.f32.xlu0 %v776
          %v778 = vpop.xlane.xlu0 %777
          %v779 = vsub.f32 %v365, %v778
          %v780 = vmul.f32 %v779, 1.442695
          %v781 = vpow.pop %v780
          %v782 = vsel %vm775, %v781, 0.0
          %783 = vadd.xlane.f32.xlu0 %v782
          %v784 = vpop.xlane.xlu0 %783
          %v785 = vrcp.pop %v784
          %v786 = vmul.f32 1.0, %v785
          %v787 = vmul.f32 %v781, %v786
          %v788 = vld [vmem:[#allocation3] sm:$0xff]
          %v790 = vsel %vm775, %v787, 0
          %792 = vmatprep.subr.mxu0 0.0
          %793 = vmatpush1.msra.mxu0 %v788
          %794 = vmatprep.subr.mxu0 0.0
          %795 = vmatpush1.msra.mxu0 0.0
          %796 = vmatprep.subr.mxu0 0.0
          %797 = vmatpush1.msra.mxu0 0.0
          %798 = vmatprep.subr.mxu0 0.0
          %799 = vmatpush1.msra.mxu0 0.0
          %800 = vmatprep.subr.mxu0 0.0
          %801 = vmatpush1.msra.mxu0 0.0
          %802 = vmatprep.subr.mxu0 0.0
          %803 = vmatpush1.msra.mxu0 0.0
          %804 = vmatprep.subr.mxu0 0.0
          %805 = vmatpush1.msra.mxu0 0.0
          %806 = vmatprep.subr.mxu0 0.0
          %807 = vmatpush1.msra.mxu0 0.0
          %808 = vmatprep.subr.mxu0 0.0
          %809 = vmatpush1.msra.mxu0 0.0
          %810 = vmatprep.subr.mxu0 0.0
          %811 = vmatpush1.msra.mxu0 0.0
          %812 = vmatprep.subr.mxu0 0.0
          %813 = vmatpush1.msra.mxu0 0.0
          %814 = vmatprep.subr.mxu0 0.0
          %815 = vmatpush1.msra.mxu0 0.0
          %816 = vmatprep.subr.mxu0 0.0
          %817 = vmatpush1.msra.mxu0 0.0
          %818 = vmatprep.subr.mxu0 0.0
          %819 = vmatpush1.msra.mxu0 0.0
          %820 = vmatprep.subr.mxu0 0.0
          %821 = vmatpush1.msra.mxu0 0.0
          %822 = vmatprep.subr.mxu0 0.0
          %823 = vmatpush1.msra.mxu0 0.0
          %824 = vmatprep.subr.mxu0 0.0
          %825 = vmatpush1.msra.mxu0 0.0
          %826 = vmatprep.subr.mxu0 0.0
          %827 = vmatpush1.msra.mxu0 0.0
          %828 = vmatprep.subr.mxu0 0.0
          %829 = vmatpush1.msra.mxu0 0.0
          %830 = vmatprep.subr.mxu0 0.0
          %831 = vmatpush1.msra.mxu0 0.0
          %832 = vmatprep.subr.mxu0 0.0
          %833 = vmatpush1.msra.mxu0 0.0
          %834 = vmatprep.subr.mxu0 0.0
          %835 = vmatpush1.msra.mxu0 0.0
          %836 = vmatprep.subr.mxu0 0.0
          %837 = vmatpush1.msra.mxu0 0.0
          %838 = vmatprep.subr.mxu0 0.0
          %839 = vmatpush1.msra.mxu0 0.0
          %840 = vmatprep.subr.mxu0 0.0
          %841 = vmatpush1.msra.mxu0 0.0
          %842 = vmatprep.subr.mxu0 0.0
          %843 = vmatpush1.msra.mxu0 0.0
          %844 = vmatprep.subr.mxu0 0.0
          %845 = vmatpush1.msra.mxu0 0.0
          %846 = vmatprep.subr.mxu0 0.0
          %847 = vmatpush1.msra.mxu0 0.0
          %848 = vmatprep.subr.mxu0 0.0
          %849 = vmatpush1.msra.mxu0 0.0
          %850 = vmatprep.subr.mxu0 0.0
          %851 = vmatpush1.msra.mxu0 0.0
          %852 = vmatprep.subr.mxu0 0.0
          %853 = vmatpush1.msra.mxu0 0.0
          %854 = vmatprep.subr.mxu0 0.0
          %855 = vmatpush1.msra.mxu0 0.0
          %856 = vmatprep.mubr.f32.mxu0 0.0
          %857 = vmatmul.mubr.f32.gmra.mrb[0].mxu0 %v790
          %v858 = vpop.f32.mrb[0].mxu0
          %v859 = vadd.f32 0.0, %v858
          %v860 = vpop.f32.mrb[0].mxu0
          %861 = vdwg.mxu0
          %v862 = vmax.f32 %v859, 0.0
          %863 = vst [vmem:[%s354] sm:$0xff] %v862
          %v865 = vlaneseq
          %v866 = vshrl.u32 %v865, 7
          %v867 = vsub.s32 0, %v866
          %v868 = vrot.slane %v366, %v867
          %869 = vset.pattern.permute.xlu0 0
          %870 = vperm.xlu0 %869, %v868
          %v871 = vpop.permute.xlu0 %870
          %v873 = vsub.f32 %v365, %v871
          %v874 = vmul.f32 %v873, 1.442695
          %v875 = vpow.pop %v874
          %v876 = vld [vmem:[#allocation2] sm:$0xff]
          %877 = vxpose.xlu0.b32.start [1/16] %v875, 128
          %878 = vxpose.xlu0.b32.cont [2/16] 0.0, 128
          %879 = vxpose.xlu0.b32.cont [3/16] 0.0, 128
          %880 = vxpose.xlu0.b32.cont [4/16] 0.0, 128
          %881 = vxpose.xlu0.b32.cont [5/16] 0.0, 128
          %882 = vxpose.xlu0.b32.cont [6/16] 0.0, 128
          %883 = vxpose.xlu0.b32.cont [7/16] 0.0, 128
          %884 = vxpose.xlu0.b32.cont [8/16] 0.0, 128
          %885 = vxpose.xlu0.b32.cont [9/16] 0.0, 128
          %886 = vxpose.xlu0.b32.cont [10/16] 0.0, 128
          %887 = vxpose.xlu0.b32.cont [11/16] 0.0, 128
          %888 = vxpose.xlu0.b32.cont [12/16] 0.0, 128
          %889 = vxpose.xlu0.b32.cont [13/16] 0.0, 128
          %890 = vxpose.xlu0.b32.cont [14/16] 0.0, 128
          %891 = vxpose.xlu0.b32.cont [15/16] 0.0, 128
          %892 = vxpose.xlu0.b32.end [16/16] 0.0, 128
          %v893 = vpop.trf.xlu0
          %v894 = vpop.trf.xlu0
          %v895 = vpop.trf.xlu0
          %v896 = vpop.trf.xlu0
          %v897 = vpop.trf.xlu0
          %v898 = vpop.trf.xlu0
          %v899 = vpop.trf.xlu0
          %v900 = vpop.trf.xlu0
          %v901 = vpop.trf.xlu0
          %v902 = vpop.trf.xlu0
          %v903 = vpop.trf.xlu0
          %v904 = vpop.trf.xlu0
          %v905 = vpop.trf.xlu0
          %v906 = vpop.trf.xlu0
          %v907 = vpop.trf.xlu0
          %v908 = vpop.trf.xlu0
          %v910 = vsel %vm775, %v893, 0
          %912 = vmatprep.subr.mxu0 0.0
          %913 = vmatpush1.msra.mxu0 %v862
          %914 = vmatprep.subr.mxu0 0.0
          %915 = vmatpush1.msra.mxu0 0.0
          %916 = vmatprep.subr.mxu0 0.0
          %917 = vmatpush1.msra.mxu0 0.0
          %918 = vmatprep.subr.mxu0 0.0
          %919 = vmatpush1.msra.mxu0 0.0
          %920 = vmatprep.subr.mxu0 0.0
          %921 = vmatpush1.msra.mxu0 0.0
          %922 = vmatprep.subr.mxu0 0.0
          %923 = vmatpush1.msra.mxu0 0.0
          %924 = vmatprep.subr.mxu0 0.0
          %925 = vmatpush1.msra.mxu0 0.0
          %926 = vmatprep.subr.mxu0 0.0
          %927 = vmatpush1.msra.mxu0 0.0
          %928 = vmatprep.subr.mxu0 0.0
          %929 = vmatpush1.msra.mxu0 0.0
          %930 = vmatprep.subr.mxu0 0.0
          %931 = vmatpush1.msra.mxu0 0.0
          %932 = vmatprep.subr.mxu0 0.0
          %933 = vmatpush1.msra.mxu0 0.0
          %934 = vmatprep.subr.mxu0 0.0
          %935 = vmatpush1.msra.mxu0 0.0
          %936 = vmatprep.subr.mxu0 0.0
          %937 = vmatpush1.msra.mxu0 0.0
          %938 = vmatprep.subr.mxu0 0.0
          %939 = vmatpush1.msra.mxu0 0.0
          %940 = vmatprep.subr.mxu0 0.0
          %941 = vmatpush1.msra.mxu0 0.0
          %942 = vmatprep.subr.mxu0 0.0
          %943 = vmatpush1.msra.mxu0 0.0
          %944 = vmatprep.subr.mxu0 0.0
          %945 = vmatpush1.msra.mxu0 0.0
          %946 = vmatprep.subr.mxu0 0.0
          %947 = vmatpush1.msra.mxu0 0.0
          %948 = vmatprep.subr.mxu0 0.0
          %949 = vmatpush1.msra.mxu0 0.0
          %950 = vmatprep.subr.mxu0 0.0
          %951 = vmatpush1.msra.mxu0 0.0
          %952 = vmatprep.subr.mxu0 0.0
          %953 = vmatpush1.msra.mxu0 0.0
          %954 = vmatprep.subr.mxu0 0.0
          %955 = vmatpush1.msra.mxu0 0.0
          %956 = vmatprep.subr.mxu0 0.0
          %957 = vmatpush1.msra.mxu0 0.0
          %958 = vmatprep.subr.mxu0 0.0
          %959 = vmatpush1.msra.mxu0 0.0
          %960 = vmatprep.subr.mxu0 0.0
          %961 = vmatpush1.msra.mxu0 0.0
          %962 = vmatprep.subr.mxu0 0.0
          %963 = vmatpush1.msra.mxu0 0.0
          %964 = vmatprep.subr.mxu0 0.0
          %965 = vmatpush1.msra.mxu0 0.0
          %966 = vmatprep.subr.mxu0 0.0
          %967 = vmatpush1.msra.mxu0 0.0
          %968 = vmatprep.subr.mxu0 0.0
          %969 = vmatpush1.msra.mxu0 0.0
          %970 = vmatprep.subr.mxu0 0.0
          %971 = vmatpush1.msra.mxu0 0.0
          %972 = vmatprep.subr.mxu0 0.0
          %973 = vmatpush1.msra.mxu0 0.0
          %974 = vmatprep.subr.mxu0 0.0
          %975 = vmatpush1.msra.mxu0 0.0
          %976 = vmatprep.mubr.f32.mxu0 0.0
          %977 = vmatmul.mubr.f32.gmra.mrb[0].mxu0 %v910
          %v978 = vpop.f32.mrb[0].mxu0
          %v979 = vadd.f32 0.0, %v978
          %v980 = vpop.f32.mrb[0].mxu0
          %981 = vdwg.mxu0
          %v982 = vadd.f32 %v876, %v979
          %983 = vst [vmem:[#allocation2] sm:$0xff] %v982
          %p984 = scmp.eq.s32.totalorder %s34, 1
          // Predicated region
          $region73: #{tpu_custom_call.1} parent=71 // pred_check
            %p985 = pneg %p984
          $region74: #{tpu_custom_call.1} parent=71 // pred_check_branch
            %987 = sbr.rel (%p985) target = $region76
          $region75: #{tpu_custom_call.1} parent=71 // pred_region
            %v988 = vld [vmem:[#allocation2] sm:$0xff]
            %v989 = vld [vmem:[#allocation4] sm:$0xff]
            %991 = vset.pattern.permute.xlu0 0
            %992 = vperm.xlu0 %991, %v989
            %v993 = vpop.permute.xlu0 %992
            %v995 = vmul.f32 %v988, %v993
            %v996 = vmax.f32 %v995, 0.0
            %997 = vst [vmem:[#allocation13] sm:$0xff] %v996
          $region76: #{tpu_custom_call.1} parent=71 // pred_fallthru
            _
        $region72: #{tpu_custom_call.1} parent=43 // pred_fallthru
          _
        %s998 = sand.u32 %s191, 1
        %s999 = scalar_lea.sflag [#allocation8], %s998
        %s1000 = sand.u32 %s191, 1
        %s1001 = smul.addr %s1000, 8
        %s1002 = scalar_lea.vmem [#allocation12], %s1001
        // Predicated region
        $region77: #{tpu_custom_call.1} parent=43 // pred_check
          %p1003 = pneg %p201
        $region78: #{tpu_custom_call.1} parent=43 // pred_check_branch
          %1005 = sbr.rel (%p1003) target = $region80
        $region79: #{tpu_custom_call.1} parent=43 // pred_region
          %s1006 = smul.u32 %s34, %s33
          %s1008 = ssub.s32 128, 128
          %1009 = vsyncadd %s999, %s1008
          %s1010 = smul.addr %s1006, 128
          %s1011 = scalar_lea.hbm %s6, %s1010
          %s1013 = sshll.u32 %s1002, 4
          %s1014 = int_to_ptr.vmem [resolvable:$true] %s1013
          %1016 = dma.vmem_to_hbm [thread:$0]  %s1014, 128, %s1011, %s999
        $region80: #{tpu_custom_call.1} parent=43 // pred_fallthru
          _
        // Predicated region
        $region81: #{tpu_custom_call.1} parent=43 // pred_check
          %p1017 = pneg %p222
        $region82: #{tpu_custom_call.1} parent=43 // pred_check_branch
          %1019 = sbr.rel (%p1017) target = $region84
        $region83: #{tpu_custom_call.1} parent=43 // pred_region
          %s1021 = ssub.s32 128, 128
          %1022 = vsyncadd [#allocation14], %s1021
          %s1024 = sshll.u32 [#allocation13], 4
          %s1025 = int_to_ptr.vmem [resolvable:$true] %s1024
          %1027 = dma.vmem_to_hbm [thread:$0]  %s1025, 128, %s7, [#allocation14]
        $region84: #{tpu_custom_call.1} parent=43 // pred_fallthru
          _
        // Predicated region
        $region85: #{tpu_custom_call.1} parent=43 // pred_check
          %p1028 = pneg %p222
        $region86: #{tpu_custom_call.1} parent=43 // pred_check_branch
          %1030 = sbr.rel (%p1028) target = $region88
        $region87: #{tpu_custom_call.1} parent=43 // pred_region
          %1031 = dma.done [#allocation14], 128
        $region88: #{tpu_custom_call.1} parent=43 // pred_fallthru
          _
      $region44: #{tpu_custom_call.1} parent=5 // pred_fallthru
        _
      %p1032 = scmp.le.s32.totalorder 2, %s24
      // Predicated region
      $region89: #{tpu_custom_call.1} parent=5 // pred_check
        %p1033 = pneg %p1032
      $region90: #{tpu_custom_call.1} parent=5 // pred_check_branch
        %1035 = sbr.rel (%p1033) target = $region92
      $region91: #{tpu_custom_call.1} parent=5 // pred_region
        %s1036 = ssub.s32 %s24, 2
        // Predicated region
        $region93: #{tpu_custom_call.1} parent=91 // pred_check
          %p1037 = pneg %p207
        $region94: #{tpu_custom_call.1} parent=91 // pred_check_branch
          %1039 = sbr.rel (%p1037) target = $region96
        $region95: #{tpu_custom_call.1} parent=91 // pred_region
          %s1040 = sand.u32 %s192, 1
          %s1041 = scalar_lea.sflag [#allocation8], %s1040
          %s1042 = sand.u32 %s192, 1
          %s1043 = smul.addr %s1042, 8
          %s1044 = scalar_lea.vmem [#allocation12], %s1043
          %1045 = dma.done %s1041, 128
        $region96: #{tpu_custom_call.1} parent=91 // pred_fallthru
          _
      $region92: #{tpu_custom_call.1} parent=5 // pred_fallthru
        _
    $region6: #{tpu_custom_call.1} parent=1 // loop_footer
      %s28 = sadd.s32 1, %s24
    $region7: #{tpu_custom_call.1} parent=1 // loop_footer_branch
      %23 = sbr.rel target = $region3
    $region8: #{tpu_custom_call.1} parent=1 // loop_exit
      _
    %1046 = vsyncpa [#allocation7], 1
    %s1047 = scalar_lea.sflag [#allocation7], 1
    %1048 = vsyncpa %s1047, 1
    %1049 = vsyncpa [#allocation10], 1
    %1050 = vsyncpa [#allocation8], 1
    %s1051 = scalar_lea.sflag [#allocation8], 1
    %1052 = vsyncpa %s1051, 1
    %1053 = vsyncpa [#allocation14], 1

</llo_original>
